<compile_context>
chip_gen: v7x
topology: tpu7x:2x2x1
jax: 0.10.0
libtpu: 0.0.40
codegen_flags: <defaults>
</compile_context>

<pallas_src>
import jax
import jax.numpy as jnp
from jax.experimental import pallas as pl
from jax.experimental.pallas import tpu as pltpu


def _exp_kernel(x_ref, o_ref):
    # Elementwise exp on the current VMEM tile (EUP transcendental, fully hidden
    # under the HBM DMAs for this mem-bound kernel).
    o_ref[...] = jnp.exp(x_ref[...])


def _ceil_div(a: int, b: int) -> int:
    return -(-a // b)


def _round_up(a: int, b: int) -> int:
    return _ceil_div(a, b) * b


_MIN_GRID_STEPS = 4  # keep pipelining + v7x 2-TC sharding alive for mid-size inputs


def sigmoid_to_log_depth(
    x: jax.Array,
    *,
    target_block_bytes: int = 4 * 1024 * 1024,  # ~4 MiB: v7x sweet spot, neutral v6e, safe w/ 32 MiB limit
    min_pallas_bytes: int = 512 * 1024,         # below this, fused jnp.exp is cheaper than a kernel launch
) -> jax.Array:
    """exp(x), matching SigmoidToLogDepth.forward. Accepts any shape (e.g. NCHW)."""
    dtype = x.dtype
    n = x.size

    # Non-float inputs: match exp's promotion semantics; not worth a kernel.
    if not jnp.issubdtype(dtype, jnp.floating):
        return jnp.exp(x)

    itemsize = jnp.dtype(dtype).itemsize

    # Fallbacks that are genuinely faster than the kernel path:
    #  * tiny inputs: launch + per-step overhead dominates; XLA fuses exp for free.
    #  * n not a multiple of 128: the old pad+slice path cost ~2-3x the HBM traffic
    #    of the kernel itself; plain jnp.exp is already at the roofline here.
    if n * itemsize < min_pallas_bytes or n % 128 != 0:
        return jnp.exp(x)

    # Widest lane count (multiple of 128) that divides n exactly: reshape is a free
    # bitcast, every store is an unmasked full-width vst, every block is one fully
    # contiguous HBM DMA (block always spans the full lane width).
    lanes = 512 if n % 512 == 0 else (256 if n % 256 == 0 else 128)
    rows = n // lanes

    # Sublane alignment per dtype width (f32 -> 8, bf16 -> 16, 1-byte -> 32).
    sublane = {4: 8, 2: 16, 1: 32}.get(itemsize, 8)

    # Row tile sized for ~target_block_bytes, aligned to the sublane multiple.
    tile_r = max(sublane, (target_block_bytes // (lanes * itemsize)) // sublane * sublane)
    if rows <= sublane:
        # Tiny slab: a single block equal to the full array dims (legal via the
        # full-dims exemption from the (8,128) divisibility rule).
        tile_r = rows
    elif rows < _MIN_GRID_STEPS * tile_r:
        # Mid-size: shrink the tile so the grid has >= _MIN_GRID_STEPS steps,
        # keeping double-buffer overlap and v7x two-core sharding effective.
        tile_r = min(tile_r, _round_up(_ceil_div(rows, _MIN_GRID_STEPS), sublane))

    grid = (_ceil_div(rows, tile_r),)  # ragged final block is masked by Pallas

    slab = x.reshape(rows, lanes)      # free bitcast for contiguous row-major inputs

    out_slab = pl.pallas_call(
        _exp_kernel,
        out_shape=jax.ShapeDtypeStruct((rows, lanes), dtype),
        grid=grid,
        in_specs=[pl.BlockSpec((tile_r, lanes), lambda i: (i, 0))],
        out_specs=pl.BlockSpec((tile_r, lanes), lambda i: (i, 0)),
        input_output_aliases={0: 0},   # same shape/dtype: reuse x's HBM buffer when donated
        compiler_params=pltpu.CompilerParams(
            dimension_semantics=("parallel",),   # shard the grid across TCs on v7x
            vmem_limit_bytes=32 * 1024 * 1024,   # 4 MiB blocks x 4 buffers fit with headroom on all gens
        ),
    )(slab)

    return out_slab.reshape(x.shape)


if __name__ == "__main__":
    key = jax.random.PRNGKey(0)
    k1, k2, k3, k4 = jax.random.split(key, 4)

    # jit so the pallas_call's input is an intermediate (aliasing is free, no copies).
    run = jax.jit(lambda a: sigmoid_to_log_depth(a, min_pallas_bytes=0))

    # 1) Small NCHW input (the module's conv-style use case); Pallas path forced
    #    so the kernel itself runs (single full-dims block).
    x1 = jax.random.uniform(k1, (2, 4, 16, 16), dtype=jnp.float32)
    o1 = jax.block_until_ready(run(x1))
    assert o1.shape == x1.shape and o1.dtype == x1.dtype
    assert jnp.allclose(o1, jnp.exp(x1), rtol=1e-6, atol=1e-6)

    # 2) Row count not a multiple of the tile: exercises the multi-step grid with a
    #    masked ragged final block (no wrapper-side padding or slicing).
    x2 = jax.random.uniform(k2, (2, 4, 24, 24), dtype=jnp.float32)
    o2 = jax.block_until_ready(run(x2))
    assert jnp.allclose(o2, jnp.exp(x2), rtol=1e-6, atol=1e-6)

    # 3) bf16 path (half the HBM bytes when downstream precision allows).
    x3 = jax.random.uniform(k3, (2, 4, 16, 16), dtype=jnp.bfloat16)
    o3 = jax.block_until_ready(run(x3))
    assert o3.dtype == jnp.bfloat16
    assert jnp.allclose(o3.astype(jnp.float32), jnp.exp(x3).astype(jnp.float32),
                        rtol=2e-2, atol=2e-2)

    # 4) Non-128-divisible element count -> roofline jnp.exp fallback (no pad/slice).
    x4 = jax.random.uniform(k4, (3, 5, 7, 11), dtype=jnp.float32)
    o4 = jax.block_until_ready(sigmoid_to_log_depth(x4))
    assert jnp.allclose(o4, jnp.exp(x4), rtol=1e-6, atol=1e-6)

    print("KERNEL_OK")
</pallas_src>

<mosaic_0001>
module attributes {stable_mosaic.version = 11 : i64} {
  func.func @_exp_kernel(%arg0: i32, %arg1: memref<4x512xf32, #tpu.memory_space<vmem>>, %arg2: memref<4x512xf32, #tpu.memory_space<vmem>>) attributes {dimension_semantics = [#tpu.dimension_semantics<parallel>], iteration_bounds = array<i64: 1>, scalar_prefetch = 0 : i64, scratch_operands = 0 : i64, tpu.core_type = #tpu.core_type<tc>, window_params = [{transform_indices = @transform_0, window_bounds = array<i64: 4, 512>}, {transform_indices = @transform_1, window_bounds = array<i64: 4, 512>}]} {
    %c0 = arith.constant 0 : index
    %c0_0 = arith.constant 0 : index
    %0 = vector.load %arg1[%c0, %c0_0] : memref<4x512xf32, #tpu.memory_space<vmem>>, vector<4x512xf32>
    %1 = math.exp %0 : vector<4x512xf32>
    %c0_1 = arith.constant 0 : index
    %c0_2 = arith.constant 0 : index
    %2 = vector.load %arg2[%c0_1, %c0_2] : memref<4x512xf32, #tpu.memory_space<vmem>>, vector<4x512xf32>
    tpu.vector_store %arg2[%c0_1, %c0_2], %1 {strides = array<i32>} : memref<4x512xf32, #tpu.memory_space<vmem>>, vector<4x512xf32>,
    return
  }
  func.func @transform_0(%arg0: i32) -> (i32, i32) {
    %c0_i32 = arith.constant 0 : i32
    %c0_i32_0 = arith.constant 0 : i32
    return %arg0, %c0_i32 : i32, i32
  }
  func.func @transform_1(%arg0: i32) -> (i32, i32) {
    %c0_i32 = arith.constant 0 : i32
    %c0_i32_0 = arith.constant 0 : i32
    return %arg0, %c0_i32 : i32, i32
  }
}

</mosaic_0001>

<llo_original>
// kernel: _lambda_.1
$region0: #{_lambda_.1}
  #allocation0 [shape = 'u32[]', space=smem, size = 0x4, offset = 0x4, fixed_abs, tag = 'smem constant byte address 0x4 - core index']
  #allocation1 [shape = 'u32[144,128]{1,0:T(1,128)}', space=vmem, size = 0x12000, scoped, tag = 'internal scratch']
  %s0 = inlined_call_operand.vmem [shape: f32[4,512], index: 0, kind: input, shape index: {}, may-alias: {0,1}]
  %s1 = inlined_call_operand.vmem [shape: f32[4,512], index: 1, kind: output, shape index: {}, may-alias: {0,1}]
  %s2 = sld [smem:[#allocation0]]
  $region14: #{_lambda_.1} parent=0
    _
  %s4 = ssub.s32 1, %s2
  %s5 = scalar_select 0, %s4, %s2
  // Predicated region
  $region2: #{_lambda_.1} parent=0 // pred_check
    _
  $region3: #{_lambda_.1} parent=0 // pred_check_branch
    %7 = sbr.rel (0) target = $region5
  $region4: #{_lambda_.1} parent=0 // pred_region
    _
  $region5: #{_lambda_.1} parent=0 // pred_fallthru
    _
  %v8 = vld [vmem:[%s0] sm:$0xff]
  %v9 = vld [vmem:[%s0 + $0x8] sm:$0xff]
  %v10 = vmul.f32 %v8, 1.442695
  %v11 = vpow.pop %v10
  %v12 = vmul.f32 %v9, 1.442695
  %v13 = vpow.pop %v12
  %14 = vst [vmem:[%s1] sm:$0xff] %v11
  %15 = vst [vmem:[%s1 + $0x8] sm:$0xff] %v13
  // Predicated region
  $region6: #{_lambda_.1} parent=0 // pred_check
    _
  $region7: #{_lambda_.1} parent=0 // pred_check_branch
    %17 = sbr.rel (0) target = $region9
  $region8: #{_lambda_.1} parent=0 // pred_region
    _
  $region9: #{_lambda_.1} parent=0 // pred_fallthru
    _
  // Predicated region
  $region10: #{_lambda_.1} parent=0 // pred_check
    _
  $region11: #{_lambda_.1} parent=0 // pred_check_branch
    %19 = sbr.rel (0) target = $region13
  $region12: #{_lambda_.1} parent=0 // pred_region
    _
  $region13: #{_lambda_.1} parent=0 // pred_fallthru
    _

</llo_original>
